<compile_context>
chip_gen: v6e
topology: v6e:2x2x1
jax: 0.10.0
libtpu: 0.0.40
codegen_flags: <defaults>
</compile_context>

<pallas_src>
import functools

import jax
import jax.numpy as jnp
from jax.experimental import pallas as pl
from jax.experimental.pallas import tpu as pltpu


def _normalize_kernel(x_ref, scale_ref, shift_ref, o_ref):
    # x_ref / o_ref:        (block_r, block_l) tile of the flattened (N*C, H*W) array
    # scale_ref / shift_ref: (block_r, 1) f32 per-row affine params (broadcast over lanes)
    x = x_ref[...].astype(jnp.float32)
    o_ref[...] = (x * scale_ref[...] + shift_ref[...]).astype(o_ref.dtype)


def _choose_blocks(num_rows, num_lanes, itemsize, target_bytes):
    """Pick (block_r, block_l) targeting ~target_bytes per buffer while
    respecting the TPU (8, 128) block constraint (or full-dim blocks)."""
    budget_elems = max(1, target_bytes // itemsize)
    if num_lanes <= budget_elems:
        block_l = num_lanes                                   # full lane dim
    else:
        block_l = max(128, (budget_elems // 128) * 128)       # multiple of 128
    rows_budget = max(1, budget_elems // block_l)
    if num_rows <= rows_budget:
        block_r = num_rows                                    # full row dim
    else:
        block_r = min(num_rows, max(8, (rows_budget // 8) * 8))  # multiple of 8
    return block_r, block_l


@functools.partial(jax.jit, static_argnames=("target_block_bytes",))
def normalize(x, mean, std, *, target_block_bytes=2 * 1024 * 1024):
    """(x - mean[None, :, None, None]) / std[None, :, None, None] for NCHW x."""
    N, C, H, W = x.shape
    R, L = N * C, H * W

    # Precompute affine params in f32 (PyTorch does buffer math in f32).
    mean32 = jnp.asarray(mean, jnp.float32)
    std32 = jnp.asarray(std, jnp.float32)
    scale = 1.0 / std32                    # (C,)
    shift = -mean32 * scale                # (C,)
    scale_r = jnp.broadcast_to(scale[None, :], (N, C)).reshape(R, 1)
    shift_r = jnp.broadcast_to(shift[None, :], (N, C)).reshape(R, 1)

    # Lane-dense flattening: H*W becomes the 128-lane axis, N*C the sublane/row axis.
    xf = x.reshape(R, L)

    block_r, block_l = _choose_blocks(
        R, L, jnp.dtype(x.dtype).itemsize, target_block_bytes
    )
    grid = (pl.cdiv(R, block_r), pl.cdiv(L, block_l))

    out = pl.pallas_call(
        _normalize_kernel,
        out_shape=jax.ShapeDtypeStruct((R, L), x.dtype),
        grid_spec=pltpu.PrefetchScalarGridSpec(
            num_scalar_prefetch=0,
            grid=grid,
            in_specs=[
                pl.BlockSpec((block_r, block_l), lambda i, j: (i, j)),  # x
                pl.BlockSpec((block_r, 1), lambda i, j: (i, 0)),        # scale
                pl.BlockSpec((block_r, 1), lambda i, j: (i, 0)),        # shift
            ],
            out_specs=pl.BlockSpec((block_r, block_l), lambda i, j: (i, j)),
        ),
        compiler_params=pltpu.CompilerParams(
            dimension_semantics=("parallel", "parallel"),
            vmem_limit_bytes=64 * 1024 * 1024,
        ),
    )(xf, scale_r, shift_r)

    return out.reshape(N, C, H, W)


if __name__ == "__main__":
    key = jax.random.PRNGKey(0)
    N, C, H, W = 2, 4, 16, 16
    x = jax.random.normal(key, (N, C, H, W), dtype=jnp.float32)

    # Deterministic per-channel "buffers", analogous to the registered
    # buffers in the PyTorch Normalizer module.
    mean = jnp.array([0.485, 0.456, 0.406, 0.5], dtype=jnp.float32)
    std = jnp.array([0.229, 0.224, 0.225, 0.25], dtype=jnp.float32)

    out = normalize(x, mean, std)
    out = jax.block_until_ready(out)

    # Reference check in plain JAX (same semantics as normalize_fn).
    ref = (x - mean[None, :, None, None]) / std[None, :, None, None]
    assert jnp.allclose(out, ref, atol=1e-5, rtol=1e-5), float(
        jnp.max(jnp.abs(out - ref))
    )

    print("KERNEL_OK")
</pallas_src>

<mosaic_0001>
module attributes {stable_mosaic.version = 11 : i64} {
  func.func @_normalize_kernel(%arg0: i32, %arg1: i32, %arg2: memref<8x256xf32, #tpu.memory_space<vmem>>, %arg3: memref<8x1xf32, #tpu.memory_space<vmem>>, %arg4: memref<8x1xf32, #tpu.memory_space<vmem>>, %arg5: memref<8x256xf32, #tpu.memory_space<vmem>>) attributes {dimension_semantics = [#tpu.dimension_semantics<parallel>, #tpu.dimension_semantics<parallel>], iteration_bounds = array<i64: 1, 1>, scalar_prefetch = 0 : i64, scratch_operands = 0 : i64, tpu.core_type = #tpu.core_type<tc>, window_params = [{transform_indices = @transform_0, window_bounds = array<i64: 8, 256>}, {transform_indices = @transform_1, window_bounds = array<i64: 8, 1>}, {transform_indices = @transform_2, window_bounds = array<i64: 8, 1>}, {transform_indices = @transform_3, window_bounds = array<i64: 8, 256>}]} {
    %c0 = arith.constant 0 : index
    %c0_0 = arith.constant 0 : index
    %0 = vector.load %arg2[%c0, %c0_0] : memref<8x256xf32, #tpu.memory_space<vmem>>, vector<8x256xf32>
    %c0_1 = arith.constant 0 : index
    %c0_2 = arith.constant 0 : index
    %1 = vector.load %arg3[%c0_1, %c0_2] : memref<8x1xf32, #tpu.memory_space<vmem>>, vector<8x1xf32>
    %2 = vector.broadcast %1 : vector<8x1xf32> to vector<8x256xf32>
    %3 = arith.mulf %0, %2 : vector<8x256xf32>
    %c0_3 = arith.constant 0 : index
    %c0_4 = arith.constant 0 : index
    %4 = vector.load %arg4[%c0_3, %c0_4] : memref<8x1xf32, #tpu.memory_space<vmem>>, vector<8x1xf32>
    %5 = vector.broadcast %4 : vector<8x1xf32> to vector<8x256xf32>
    %6 = arith.addf %3, %5 : vector<8x256xf32>
    %c0_5 = arith.constant 0 : index
    %c0_6 = arith.constant 0 : index
    %7 = vector.load %arg5[%c0_5, %c0_6] : memref<8x256xf32, #tpu.memory_space<vmem>>, vector<8x256xf32>
    tpu.vector_store %arg5[%c0_5, %c0_6], %6 {strides = array<i32>} : memref<8x256xf32, #tpu.memory_space<vmem>>, vector<8x256xf32>,
    return
  }
  func.func @transform_0(%arg0: i32, %arg1: i32) -> (i32, i32) {
    %c0_i32 = arith.constant 0 : i32
    return %arg0, %arg1 : i32, i32
  }
  func.func @transform_1(%arg0: i32, %arg1: i32) -> (i32, i32) {
    %c0_i32 = arith.constant 0 : i32
    %c0_i32_0 = arith.constant 0 : i32
    return %arg0, %c0_i32 : i32, i32
  }
  func.func @transform_2(%arg0: i32, %arg1: i32) -> (i32, i32) {
    %c0_i32 = arith.constant 0 : i32
    %c0_i32_0 = arith.constant 0 : i32
    return %arg0, %c0_i32 : i32, i32
  }
  func.func @transform_3(%arg0: i32, %arg1: i32) -> (i32, i32) {
    %c0_i32 = arith.constant 0 : i32
    return %arg0, %arg1 : i32, i32
  }
}

</mosaic_0001>

<llo_original>
// kernel: normalize.1
$region0: #{normalize.1}
  #allocation0 [shape = 'u32[]', space=smem, size = 0x4, offset = 0x4, fixed_abs, tag = 'smem constant byte address 0x4 - core index']
  #allocation1 [shape = 'u32[144,128]{1,0:T(1,128)}', space=vmem, size = 0x12000, scoped, tag = 'internal scratch']
  %s0 = inlined_call_operand.vmem [shape: f32[8,256], index: 0, kind: input, shape index: {}]
  %s1 = inlined_call_operand.vmem [shape: f32[8,1], index: 1, kind: input, shape index: {}]
  %s2 = inlined_call_operand.vmem [shape: f32[8,1], index: 2, kind: input, shape index: {}]
  %s3 = inlined_call_operand.vmem [shape: f32[8,256], index: 3, kind: output, shape index: {}]
  %s4 = sld [smem:[#allocation0]]
  $region22: #{normalize.1} parent=0
    _
  %s6 = ssub.s32 1, %s4
  %s7 = scalar_select 0, %s6, %s4
  // Predicated region
  $region2: #{normalize.1} parent=0 // pred_check
    _
  $region3: #{normalize.1} parent=0 // pred_check_branch
    %9 = sbr.rel (0) target = $region5
  $region4: #{normalize.1} parent=0 // pred_region
    _
  $region5: #{normalize.1} parent=0 // pred_fallthru
    _
  // Predicated region
  $region6: #{normalize.1} parent=0 // pred_check
    _
  $region7: #{normalize.1} parent=0 // pred_check_branch
    %11 = sbr.rel (0) target = $region9
  $region8: #{normalize.1} parent=0 // pred_region
    _
  $region9: #{normalize.1} parent=0 // pred_fallthru
    _
  // Predicated region
  $region10: #{normalize.1} parent=0 // pred_check
    _
  $region11: #{normalize.1} parent=0 // pred_check_branch
    %13 = sbr.rel (0) target = $region13
  $region12: #{normalize.1} parent=0 // pred_region
    _
  $region13: #{normalize.1} parent=0 // pred_fallthru
    _
  %v14 = vld [vmem:[%s0] sm:$0xff]
  %v15 = vld [vmem:[%s0 + $0x8] sm:$0xff]
  %v16 = vld [vmem:[%s1] sm:$0xff]
  %18 = vset.pattern.permute.xlu0 0
  %19 = vperm.xlu0 %18, %v16
  %v20 = vpop.permute.xlu0 %19
  %v22 = vmul.f32 %v14, %v20
  %v23 = vmul.f32 %v15, %v20
  %v24 = vld [vmem:[%s2] sm:$0xff]
  %26 = vset.pattern.permute.xlu0 0
  %27 = vperm.xlu0 %26, %v24
  %v28 = vpop.permute.xlu0 %27
  %v30 = vadd.f32 %v22, %v28
  %v31 = vadd.f32 %v23, %v28
  %32 = vst [vmem:[%s3] sm:$0xff] %v30
  %33 = vst [vmem:[%s3 + $0x8] sm:$0xff] %v31
  // Predicated region
  $region14: #{normalize.1} parent=0 // pred_check
    _
  $region15: #{normalize.1} parent=0 // pred_check_branch
    %35 = sbr.rel (0) target = $region17
  $region16: #{normalize.1} parent=0 // pred_region
    _
  $region17: #{normalize.1} parent=0 // pred_fallthru
    _
  // Predicated region
  $region18: #{normalize.1} parent=0 // pred_check
    _
  $region19: #{normalize.1} parent=0 // pred_check_branch
    %37 = sbr.rel (0) target = $region21
  $region20: #{normalize.1} parent=0 // pred_region
    _
  $region21: #{normalize.1} parent=0 // pred_fallthru
    _

</llo_original>
